<compile_context>
chip_gen: v5e
topology: v5e:2x2
jax: 0.10.0
libtpu: 0.0.40
codegen_flags: <defaults>
</compile_context>

<pallas_src>
import jax
import jax.numpy as jnp
from jax.experimental import pallas as pl
from jax.experimental.pallas import tpu as pltpu


def _leaky_relu(x, slope=0.2):
    return jnp.where(x > 0, x, slope * x)


def _fused_kernel(x_ref, p_ref, w2_ref, o_ref):
    # x:  [B, Z]    f32
    # p:  [Z+4, D]  f32 packed param slab:
    #       rows 0..Z-1 : w1 ([Z, D], linear1 weight, [in, out] layout)
    #       row  Z      : b1 ([1, D])
    #       row  Z+1    : b2 ([1, D])
    #       row  Z+2    : w3 ([1, D], linear3 weight as a row)
    #       row  Z+3    : b3 in lane 0, zeros elsewhere
    # w2: [B, D, D] bf16 (linear2 weight, row-major split of [B*D, D])
    # o:  [1, 1]    f32
    B, Z = x_ref.shape
    D = p_ref.shape[1]

    w1 = p_ref[0:Z, :].astype(jnp.bfloat16)        # [Z, D] bf16
    b1 = p_ref[Z:Z + 1, :]                          # [1, D] f32
    b2 = p_ref[Z + 1:Z + 2, :]                      # [1, D] f32
    w3 = p_ref[Z + 2:Z + 3, :]                      # [1, D] f32
    b3_row = p_ref[Z + 3:Z + 4, :]                  # [1, D] f32, b3 at lane 0

    # Stage 1: h = leaky_relu(x @ w1 + b1); bf16 MXU inputs, f32 accumulation.
    h = jnp.dot(x_ref[...].astype(jnp.bfloat16), w1,
                preferred_element_type=jnp.float32)        # [B, D] f32
    h = _leaky_relu(h + b1)

    # Stage 2 (merged batch): equivalent to h.reshape(1, B*D) @ w2_flat.
    # One batched MXU contraction (no per-b slices / pops / VPU adds), then a
    # cheap sum over the leading b axis.
    h3 = h.astype(w2_ref.dtype).reshape(B, 1, D)            # [B, 1, D] bf16
    part = jnp.einsum('bqk,bko->bqo', h3, w2_ref[...],
                      preferred_element_type=jnp.float32)   # [B, 1, D] f32
    y = _leaky_relu(jnp.sum(part, axis=0) + b2)             # [1, D] f32

    # Stage 3 on the VPU/XLU: z = y . w3 + b3 (b3 folded into the lane reduce).
    z = jnp.sum(y * w3 + b3_row, axis=-1, keepdims=True)    # [1, 1] f32
    # sigmoid: for z << 0, exp(-z) saturates to inf -> result 0.0 (the correct
    # limit); no NaNs either direction at f32.
    o_ref[...] = (1.0 / (1.0 + jnp.exp(-z))).astype(o_ref.dtype)


def pack_params(params):
    """One-time packing of the small f32 params into a single [Z+4, D] slab."""
    w1, b1, w2, b2, w3, b3 = params
    Z, D = w1.shape
    b3_row = jnp.pad(b3.astype(jnp.float32), ((0, 0), (0, D - 1)))
    slab = jnp.concatenate(
        [w1.astype(jnp.float32), b1.astype(jnp.float32),
         b2.astype(jnp.float32), w3.astype(jnp.float32), b3_row], axis=0)
    return slab, w2


def zdiscriminator_mergebatch(x, slab, w2):
    """x: [B, Z] f32, slab: [Z+4, D] f32, w2: [B*D, D] bf16 -> [1, 1] f32."""
    B, Z = x.shape
    D = slab.shape[1]
    assert slab.shape[0] == Z + 4, (slab.shape, Z)
    assert w2.shape == (B * D, D), (w2.shape, B, D)
    # Free row-major major-dim split; matches PyTorch view(1, -1) flattening:
    # rows [b*D : (b+1)*D] of w2 become w2_r[b].
    w2_r = w2.reshape(B, D, D)

    def vmem():
        return pl.BlockSpec(memory_space=pltpu.MemorySpace.VMEM)

    return pl.pallas_call(
        _fused_kernel,
        out_shape=jax.ShapeDtypeStruct((1, 1), jnp.float32),
        in_specs=[vmem(), vmem(), vmem()],
        out_specs=vmem(),
    )(x, slab, w2_r)


def init_params(key, z_size, batch_size, d, std=0.02, w2_dtype=jnp.bfloat16):
    # Weights ~ N(0, std) like weight_init; biases drawn nonzero here so the
    # test actually exercises the bias / packing paths (forward semantics are
    # identical for any parameter values).  Weights stored [in, out]; w2 bf16.
    k1, k2, k3, k4, k5, k6 = jax.random.split(key, 6)
    w1 = std * jax.random.normal(k1, (z_size, d), jnp.float32)
    b1 = std * jax.random.normal(k4, (1, d), jnp.float32)
    w2 = (std * jax.random.normal(k2, (d * batch_size, d), jnp.float32)).astype(w2_dtype)
    b2 = std * jax.random.normal(k5, (1, d), jnp.float32)
    w3 = std * jax.random.normal(k3, (1, d), jnp.float32)   # linear3 weight as a row
    b3 = std * jax.random.normal(k6, (1, 1), jnp.float32)
    return (w1, b1, w2, b2, w3, b3)


def reference_forward(x, params):
    # Pure-JAX reference with the same (bf16-stored) w2; math in f32.
    w1, b1, w2, b2, w3, b3 = params
    h = jax.nn.leaky_relu(x @ w1 + b1, 0.2).reshape(1, -1)
    h = jax.nn.leaky_relu(h @ w2.astype(jnp.float32) + b2, 0.2)
    return jax.nn.sigmoid(h @ w3.T + b3)


if __name__ == "__main__":
    z_size, batch_size, d = 32, 8, 128  # d=128 is the module default
    key = jax.random.PRNGKey(0)
    kx, kp = jax.random.split(key)
    x = jax.random.normal(kx, (batch_size, z_size), jnp.float32)
    params = init_params(kp, z_size, batch_size, d)
    slab, w2 = pack_params(params)

    out = jax.block_until_ready(zdiscriminator_mergebatch(x, slab, w2))
    ref = reference_forward(x, params)

    assert out.shape == (1, 1), out.shape
    # bf16 MXU path (stages 1-2) vs f32 reference math -> relaxed tolerance.
    assert jnp.allclose(out, ref, atol=2e-2, rtol=2e-2), (out, ref)
    print("KERNEL_OK")
</pallas_src>

<mosaic_0001>
module attributes {stable_mosaic.version = 11 : i64} {
  func.func @_fused_kernel(%arg0: memref<8x32xf32, #tpu.memory_space<vmem>>, %arg1: memref<36x128xf32, #tpu.memory_space<vmem>>, %arg2: memref<8x128x128xbf16, #tpu.memory_space<vmem>>, %arg3: memref<1x1xf32, #tpu.memory_space<vmem>>) attributes {dimension_semantics = [], scalar_prefetch = 0 : i64, scratch_operands = 0 : i64, tpu.core_type = #tpu.core_type<tc>} {
    %c0 = arith.constant 0 : index
    %c0_0 = arith.constant 0 : index
    %0 = vector.load %arg1[%c0, %c0_0] : memref<36x128xf32, #tpu.memory_space<vmem>>, vector<32x128xf32>
    %1 = arith.truncf %0 : vector<32x128xf32> to vector<32x128xbf16>
    %c32 = arith.constant 32 : index
    %c0_1 = arith.constant 0 : index
    %2 = vector.load %arg1[%c32, %c0_1] : memref<36x128xf32, #tpu.memory_space<vmem>>, vector<1x128xf32>
    %c33 = arith.constant 33 : index
    %c0_2 = arith.constant 0 : index
    %3 = vector.load %arg1[%c33, %c0_2] : memref<36x128xf32, #tpu.memory_space<vmem>>, vector<1x128xf32>
    %c34 = arith.constant 34 : index
    %c0_3 = arith.constant 0 : index
    %4 = vector.load %arg1[%c34, %c0_3] : memref<36x128xf32, #tpu.memory_space<vmem>>, vector<1x128xf32>
    %c35 = arith.constant 35 : index
    %c0_4 = arith.constant 0 : index
    %5 = vector.load %arg1[%c35, %c0_4] : memref<36x128xf32, #tpu.memory_space<vmem>>, vector<1x128xf32>
    %c0_5 = arith.constant 0 : index
    %c0_6 = arith.constant 0 : index
    %6 = vector.load %arg0[%c0_5, %c0_6] : memref<8x32xf32, #tpu.memory_space<vmem>>, vector<8x32xf32>
    %7 = arith.truncf %6 : vector<8x32xf32> to vector<8x32xbf16>
    %cst = arith.constant dense<0.000000e+00> : vector<8x128xf32>
    %8 = tpu.matmul %7, %1, %cst {dimension_numbers = #tpu.dot_dimension_numbers<[1], [0], [0], [1], [0, 0, 1, 1], [], []>} : vector<8x32xbf16>, vector<32x128xbf16>, vector<8x128xf32> -> vector<8x128xf32>
    %9 = vector.broadcast %2 : vector<1x128xf32> to vector<8x128xf32>
    %10 = arith.addf %8, %9 : vector<8x128xf32>
    %cst_7 = arith.constant 0.000000e+00 : f32
    %11 = vector.broadcast %cst_7 : f32 to vector<8x128xf32>
    %12 = arith.cmpf ogt, %10, %11 : vector<8x128xf32>
    %cst_8 = arith.constant 2.000000e-01 : f32
    %13 = vector.broadcast %cst_8 : f32 to vector<8x128xf32>
    %14 = arith.mulf %13, %10 : vector<8x128xf32>
    %15 = arith.select %12, %10, %14 : vector<8x128xi1>, vector<8x128xf32>
    %16 = arith.truncf %15 : vector<8x128xf32> to vector<8x128xbf16>
    %17 = vector.shape_cast %16 : vector<8x128xbf16> to vector<8x1x128xbf16>
    %c0_9 = arith.constant 0 : index
    %c0_10 = arith.constant 0 : index
    %c0_11 = arith.constant 0 : index
    %18 = vector.load %arg2[%c0_9, %c0_10, %c0_11] : memref<8x128x128xbf16, #tpu.memory_space<vmem>>, vector<8x128x128xbf16>
    "tpu.trace_start"() <{level = 10 : i32, message = "bqk,bko->bqo"}> : () -> ()
    %cst_12 = arith.constant dense<0.000000e+00> : vector<8x1x128xf32>
    %19 = tpu.matmul %17, %18, %cst_12 {dimension_numbers = #tpu.dot_dimension_numbers<[2], [1], [1], [2], [0, 0, 0, 1, 1, 2], [0], [0]>} : vector<8x1x128xbf16>, vector<8x128x128xbf16>, vector<8x1x128xf32> -> vector<8x1x128xf32>
    "tpu.trace_stop"() : () -> ()
    %cst_13 = arith.constant dense<0.000000e+00> : vector<1x128xf32>
    %20 = vector.multi_reduction <add>, %19, %cst_13 [0] : vector<8x1x128xf32> to vector<1x128xf32>
    %21 = arith.addf %20, %3 : vector<1x128xf32>
    %cst_14 = arith.constant 0.000000e+00 : f32
    %22 = vector.broadcast %cst_14 : f32 to vector<1x128xf32>
    %23 = arith.cmpf ogt, %21, %22 : vector<1x128xf32>
    %cst_15 = arith.constant 2.000000e-01 : f32
    %24 = vector.broadcast %cst_15 : f32 to vector<1x128xf32>
    %25 = arith.mulf %24, %21 : vector<1x128xf32>
    %26 = arith.select %23, %21, %25 : vector<1x128xi1>, vector<1x128xf32>
    %27 = arith.mulf %26, %4 : vector<1x128xf32>
    %28 = arith.addf %27, %5 : vector<1x128xf32>
    %cst_16 = arith.constant dense<0.000000e+00> : vector<1xf32>
    %29 = vector.multi_reduction <add>, %28, %cst_16 [1] : vector<1x128xf32> to vector<1xf32>
    %30 = vector.shape_cast %29 : vector<1xf32> to vector<1x1xf32>
    %cst_17 = arith.constant 0.000000e+00 : f32
    %31 = vector.broadcast %cst_17 : f32 to vector<1x1xf32>
    %32 = arith.subf %31, %30 : vector<1x1xf32>
    %33 = math.exp %32 : vector<1x1xf32>
    %cst_18 = arith.constant 1.000000e+00 : f32
    %34 = vector.broadcast %cst_18 : f32 to vector<1x1xf32>
    %35 = arith.addf %34, %33 : vector<1x1xf32>
    %cst_19 = arith.constant 1.000000e+00 : f32
    %36 = vector.broadcast %cst_19 : f32 to vector<1x1xf32>
    %37 = arith.divf %36, %35 : vector<1x1xf32>
    %c0_20 = arith.constant 0 : index
    %c0_21 = arith.constant 0 : index
    %38 = vector.load %arg3[%c0_20, %c0_21] : memref<1x1xf32, #tpu.memory_space<vmem>>, vector<1x1xf32>
    tpu.vector_store %arg3[%c0_20, %c0_21], %37 {strides = array<i32>} : memref<1x1xf32, #tpu.memory_space<vmem>>, vector<1x1xf32>,
    return
  }
}

</mosaic_0001>

<llo_original>
// kernel: tpu_custom_call.1
$region0: #{tpu_custom_call.1}
  #allocation0 [shape = 'u32[]', space=smem, size = 0x4, offset = 0x4, fixed_abs, tag = 'smem constant byte address 0x4 - core index']
  #allocation1 [shape = 'u32[72,128]{1,0:T(1,128)}', space=vmem, size = 0x9000, scoped, tag = 'internal scratch']
  %s0 = inlined_call_operand.hbm [shape: f32[8,32], index: 0, kind: input, shape index: {}]
  %s1 = inlined_call_operand.hbm [shape: f32[36,128], index: 1, kind: input, shape index: {}]
  %s2 = inlined_call_operand.hbm [shape: bf16[8,128,128], index: 2, kind: input, shape index: {}]
  %s3 = inlined_call_operand.hbm [shape: f32[1,1], index: 3, kind: output, shape index: {}]
  %s4 = sld [smem:[#allocation0]]
  $region34: #{tpu_custom_call.1} parent=0
    _
  %s6 = ssub.s32 1, %s4
  %s7 = scalar_select 0, %s6, %s4
  $region1: #{tpu_custom_call.1} parent=0
    #allocation2 [shape = 'u8[4096]{0}', space=vmem, size = 0x1000, scoped, tag = 'input window, operand 0, single buffered']
    #allocation3 [shape = 's32[1]{0}', space=sflag, size = 0x4, scoped, tag = 'scoped memory for tpu_custom_call.1']
    #allocation4 [shape = 's32[1]{0}', space=sflag, size = 0x4, scoped, tag = 'scoped memory for tpu_custom_call.1']
    #allocation5 [shape = 'u8[20480]{0}', space=vmem, size = 0x5000, scoped, tag = 'input window, operand 1, single buffered']
    #allocation6 [shape = 's32[1]{0}', space=sflag, size = 0x4, scoped, tag = 'scoped memory for tpu_custom_call.1']
    #allocation7 [shape = 'u8[262144]{0}', space=vmem, size = 0x40000, scoped, tag = 'input window, operand 2, single buffered']
    #allocation8 [shape = 'u8[512]{0}', space=vmem, size = 0x400, scoped, tag = 'output window, operand 0, single buffered']
    %8 = vsyncpa [#allocation3], 0
    %9 = vsyncpa [#allocation6], 0
    %10 = vsyncpa [#allocation4], 0
    // Predicated region
    $region2: #{tpu_custom_call.1} parent=1 // pred_check
      _
    $region3: #{tpu_custom_call.1} parent=1 // pred_check_branch
      %12 = sbr.rel (0) target = $region5
    $region4: #{tpu_custom_call.1} parent=1 // pred_region
      %14 = vsyncadd [#allocation3], 0
      %s16 = sshll.u32 %s0, 4
      %s17 = int_to_ptr.hbm [resolvable:$true] %s16
      %s18 = sshll.u32 [#allocation2], 4
      %s19 = int_to_ptr.vmem [resolvable:$true] %s18
      %21 = dma.hbm_to_vmem [thread:$0]  %s17, 128, %s19, [#allocation3]
    $region5: #{tpu_custom_call.1} parent=1 // pred_fallthru
      _
    // Predicated region
    $region6: #{tpu_custom_call.1} parent=1 // pred_check
      _
    $region7: #{tpu_custom_call.1} parent=1 // pred_check_branch
      %23 = sbr.rel (0) target = $region9
    $region8: #{tpu_custom_call.1} parent=1 // pred_region
      %25 = vsyncadd [#allocation6], 0
      %s26 = sshll.u32 %s1, 4
      %s27 = int_to_ptr.hbm [resolvable:$true] %s26
      %s28 = sshll.u32 [#allocation5], 4
      %s29 = int_to_ptr.vmem [resolvable:$true] %s28
      %34 = dma.hbm_to_vmem [thread:$0]  %s27, 640, %s29, [#allocation6], 128, 128, 8
    $region9: #{tpu_custom_call.1} parent=1 // pred_fallthru
      _
    // Predicated region
    $region10: #{tpu_custom_call.1} parent=1 // pred_check
      _
    $region11: #{tpu_custom_call.1} parent=1 // pred_check_branch
      %36 = sbr.rel (0) target = $region13
    $region12: #{tpu_custom_call.1} parent=1 // pred_region
      %38 = vsyncadd [#allocation6], 0
      %s39 = sshll.u32 %s2, 4
      %s40 = int_to_ptr.hbm [resolvable:$true] %s39
      %s41 = sshll.u32 [#allocation7], 4
      %s42 = int_to_ptr.vmem [resolvable:$true] %s41
      %47 = dma.hbm_to_vmem [thread:$0]  %s40, 8192, %s42, [#allocation6], 64, 64, 4
    $region13: #{tpu_custom_call.1} parent=1 // pred_fallthru
      _
    // Predicated region
    $region14: #{tpu_custom_call.1} parent=1 // pred_check
      _
    $region15: #{tpu_custom_call.1} parent=1 // pred_check_branch
      %49 = sbr.rel (0) target = $region17
    $region16: #{tpu_custom_call.1} parent=1 // pred_region
      %51 = dma.done [#allocation3], 128
    $region17: #{tpu_custom_call.1} parent=1 // pred_fallthru
      _
    // Predicated region
    $region18: #{tpu_custom_call.1} parent=1 // pred_check
      _
    $region19: #{tpu_custom_call.1} parent=1 // pred_check_branch
      %53 = sbr.rel (0) target = $region21
    $region20: #{tpu_custom_call.1} parent=1 // pred_region
      %55 = dma.done [#allocation6], 640
    $region21: #{tpu_custom_call.1} parent=1 // pred_fallthru
      _
    // Predicated region
    $region22: #{tpu_custom_call.1} parent=1 // pred_check
      _
    $region23: #{tpu_custom_call.1} parent=1 // pred_check_branch
      %57 = sbr.rel (0) target = $region25
    $region24: #{tpu_custom_call.1} parent=1 // pred_region
      %59 = dma.done [#allocation6], 8192
    $region25: #{tpu_custom_call.1} parent=1 // pred_fallthru
      _
    %v61 = vld [vmem:[#allocation5] sm:$0xff]
    %v62 = vld [vmem:[#allocation5 + $0x8] sm:$0xff]
    %v63 = vld [vmem:[#allocation5 + $0x10] sm:$0xff]
    %v64 = vld [vmem:[#allocation5 + $0x18] sm:$0xff]
    %v65 = vpack.c.bf16 %v62, %v61
    %v66 = vpack.c.bf16 %v64, %v63
    %v67 = vld [vmem:[#allocation5 + $0x20] sm:$0x1]
    %v68 = vld [vmem:[#allocation5 + $0x21] sm:$0x1]
    %v69 = vld [vmem:[#allocation5 + $0x22] sm:$0x1]
    %v70 = vld [vmem:[#allocation5 + $0x23] sm:$0x1]
    %v71 = vld [vmem:[#allocation2] sm:$0xff]
    %v72 = vpack.c.bf16 %v71, %v71
    %v73 = vperm.slane %v67, 0
    %vm74 = vcmask 261120
    %v76 = vsel %vm74, %v72, 0
    %78 = vmatpush.bf16.msra.mxu0 0
    %79 = vmatpush.bf16.msra.mxu0 0
    %80 = vmatpush.bf16.msra.mxu0 0
    %81 = vmatpush.bf16.msra.mxu0 0
    %82 = vmatpush.bf16.msra.mxu0 0
    %83 = vmatpush.bf16.msra.mxu0 0
    %84 = vmatpush.bf16.msra.mxu0 %v66
    %85 = vmatpush.bf16.msra.mxu0 %v65
    %86 = vmatmul.bf16.gmra.mxu0 %v76
    %v87 = vpop.f32.mrf.mxu0
    %v88 = vadd.f32 %v73, %v87
    %v89 = vpop.f32.mrf.mxu0
    %90 = vdwg.mxu0
    %vm91 = vcmp.gt.f32.partialorder %v88, 0.0
    %v92 = vmul.f32 %v88, 0.2
    %v93 = vsel %vm91, %v88, %v92
    %v94 = vpack.c.bf16 %v93, %v93
    %v96 = vrot.slane %v94, 3
    %vm97 = vcmask 1040384
    %v100 = vsel %vm97, %v94, %v96
    %vm102 = vcmask 1041409
    %v103 = vsel %vm102, %v94, %v96
    %v105 = vrot.slane %v103, 1
    %vm106 = vcmask 1042434
    %v107 = vsel %vm106, %v94, %v96
    %v109 = vrot.slane %v107, 2
    %vm110 = vcmask 1043459
    %v111 = vsel %vm110, %v94, %v96
    %v113 = vrot.slane %v111, 3
    %v114 = vunpack.i.l.s16 %v100
    %v115 = vunpack.i.h.s16 %v100
    %v116 = vunpack.i.l.s16 %v105
    %v117 = vunpack.i.h.s16 %v105
    %v118 = vunpack.i.l.s16 %v109
    %v119 = vunpack.i.h.s16 %v109
    %v120 = vunpack.i.l.s16 %v113
    %v121 = vunpack.i.h.s16 %v113
    %v122 = vld [vmem:[#allocation7] sm:$0xf]
    %v123 = vld [vmem:[#allocation7 + $0x4] sm:$0xf]
    %v124 = vld [vmem:[#allocation7 + $0x8] sm:$0xf]
    %v125 = vld [vmem:[#allocation7 + $0xc] sm:$0xf]
    %v126 = vld [vmem:[#allocation7 + $0x10] sm:$0xf]
    %v127 = vld [vmem:[#allocation7 + $0x14] sm:$0xf]
    %v128 = vld [vmem:[#allocation7 + $0x18] sm:$0xf]
    %v129 = vld [vmem:[#allocation7 + $0x1c] sm:$0xf]
    %v130 = vld [vmem:[#allocation7 + $0x20] sm:$0xf]
    %v131 = vld [vmem:[#allocation7 + $0x24] sm:$0xf]
    %v132 = vld [vmem:[#allocation7 + $0x28] sm:$0xf]
    %v133 = vld [vmem:[#allocation7 + $0x2c] sm:$0xf]
    %v134 = vld [vmem:[#allocation7 + $0x30] sm:$0xf]
    %v135 = vld [vmem:[#allocation7 + $0x34] sm:$0xf]
    %v136 = vld [vmem:[#allocation7 + $0x38] sm:$0xf]
    %v137 = vld [vmem:[#allocation7 + $0x3c] sm:$0xf]
    %v138 = vld [vmem:[#allocation7 + $0x40] sm:$0xf]
    %v139 = vld [vmem:[#allocation7 + $0x44] sm:$0xf]
    %v140 = vld [vmem:[#allocation7 + $0x48] sm:$0xf]
    %v141 = vld [vmem:[#allocation7 + $0x4c] sm:$0xf]
    %v142 = vld [vmem:[#allocation7 + $0x50] sm:$0xf]
    %v143 = vld [vmem:[#allocation7 + $0x54] sm:$0xf]
    %v144 = vld [vmem:[#allocation7 + $0x58] sm:$0xf]
    %v145 = vld [vmem:[#allocation7 + $0x5c] sm:$0xf]
    %v146 = vld [vmem:[#allocation7 + $0x60] sm:$0xf]
    %v147 = vld [vmem:[#allocation7 + $0x64] sm:$0xf]
    %v148 = vld [vmem:[#allocation7 + $0x68] sm:$0xf]
    %v149 = vld [vmem:[#allocation7 + $0x6c] sm:$0xf]
    %v150 = vld [vmem:[#allocation7 + $0x70] sm:$0xf]
    %v151 = vld [vmem:[#allocation7 + $0x74] sm:$0xf]
    %v152 = vld [vmem:[#allocation7 + $0x78] sm:$0xf]
    %v153 = vld [vmem:[#allocation7 + $0x7c] sm:$0xf]
    %v154 = vld [vmem:[#allocation7 + $0x80] sm:$0xf]
    %v155 = vld [vmem:[#allocation7 + $0x84] sm:$0xf]
    %v156 = vld [vmem:[#allocation7 + $0x88] sm:$0xf]
    %v157 = vld [vmem:[#allocation7 + $0x8c] sm:$0xf]
    %v158 = vld [vmem:[#allocation7 + $0x90] sm:$0xf]
    %v159 = vld [vmem:[#allocation7 + $0x94] sm:$0xf]
    %v160 = vld [vmem:[#allocation7 + $0x98] sm:$0xf]
    %v161 = vld [vmem:[#allocation7 + $0x9c] sm:$0xf]
    %v162 = vld [vmem:[#allocation7 + $0xa0] sm:$0xf]
    %v163 = vld [vmem:[#allocation7 + $0xa4] sm:$0xf]
    %v164 = vld [vmem:[#allocation7 + $0xa8] sm:$0xf]
    %v165 = vld [vmem:[#allocation7 + $0xac] sm:$0xf]
    %v166 = vld [vmem:[#allocation7 + $0xb0] sm:$0xf]
    %v167 = vld [vmem:[#allocation7 + $0xb4] sm:$0xf]
    %v168 = vld [vmem:[#allocation7 + $0xb8] sm:$0xf]
    %v169 = vld [vmem:[#allocation7 + $0xbc] sm:$0xf]
    %v170 = vld [vmem:[#allocation7 + $0xc0] sm:$0xf]
    %v171 = vld [vmem:[#allocation7 + $0xc4] sm:$0xf]
    %v172 = vld [vmem:[#allocation7 + $0xc8] sm:$0xf]
    %v173 = vld [vmem:[#allocation7 + $0xcc] sm:$0xf]
    %v174 = vld [vmem:[#allocation7 + $0xd0] sm:$0xf]
    %v175 = vld [vmem:[#allocation7 + $0xd4] sm:$0xf]
    %v176 = vld [vmem:[#allocation7 + $0xd8] sm:$0xf]
    %v177 = vld [vmem:[#allocation7 + $0xdc] sm:$0xf]
    %v178 = vld [vmem:[#allocation7 + $0xe0] sm:$0xf]
    %v179 = vld [vmem:[#allocation7 + $0xe4] sm:$0xf]
    %v180 = vld [vmem:[#allocation7 + $0xe8] sm:$0xf]
    %v181 = vld [vmem:[#allocation7 + $0xec] sm:$0xf]
    %v182 = vld [vmem:[#allocation7 + $0xf0] sm:$0xf]
    %v183 = vld [vmem:[#allocation7 + $0xf4] sm:$0xf]
    %v184 = vld [vmem:[#allocation7 + $0xf8] sm:$0xf]
    %v185 = vld [vmem:[#allocation7 + $0xfc] sm:$0xf]
    %v186 = vld [vmem:[#allocation7 + $0x100] sm:$0xf]
    %v187 = vld [vmem:[#allocation7 + $0x104] sm:$0xf]
    %v188 = vld [vmem:[#allocation7 + $0x108] sm:$0xf]
    %v189 = vld [vmem:[#allocation7 + $0x10c] sm:$0xf]
    %v190 = vld [vmem:[#allocation7 + $0x110] sm:$0xf]
    %v191 = vld [vmem:[#allocation7 + $0x114] sm:$0xf]
    %v192 = vld [vmem:[#allocation7 + $0x118] sm:$0xf]
    %v193 = vld [vmem:[#allocation7 + $0x11c] sm:$0xf]
    %v194 = vld [vmem:[#allocation7 + $0x120] sm:$0xf]
    %v195 = vld [vmem:[#allocation7 + $0x124] sm:$0xf]
    %v196 = vld [vmem:[#allocation7 + $0x128] sm:$0xf]
    %v197 = vld [vmem:[#allocation7 + $0x12c] sm:$0xf]
    %v198 = vld [vmem:[#allocation7 + $0x130] sm:$0xf]
    %v199 = vld [vmem:[#allocation7 + $0x134] sm:$0xf]
    %v200 = vld [vmem:[#allocation7 + $0x138] sm:$0xf]
    %v201 = vld [vmem:[#allocation7 + $0x13c] sm:$0xf]
    %v202 = vld [vmem:[#allocation7 + $0x140] sm:$0xf]
    %v203 = vld [vmem:[#allocation7 + $0x144] sm:$0xf]
    %v204 = vld [vmem:[#allocation7 + $0x148] sm:$0xf]
    %v205 = vld [vmem:[#allocation7 + $0x14c] sm:$0xf]
    %v206 = vld [vmem:[#allocation7 + $0x150] sm:$0xf]
    %v207 = vld [vmem:[#allocation7 + $0x154] sm:$0xf]
    %v208 = vld [vmem:[#allocation7 + $0x158] sm:$0xf]
    %v209 = vld [vmem:[#allocation7 + $0x15c] sm:$0xf]
    %v210 = vld [vmem:[#allocation7 + $0x160] sm:$0xf]
    %v211 = vld [vmem:[#allocation7 + $0x164] sm:$0xf]
    %v212 = vld [vmem:[#allocation7 + $0x168] sm:$0xf]
    %v213 = vld [vmem:[#allocation7 + $0x16c] sm:$0xf]
    %v214 = vld [vmem:[#allocation7 + $0x170] sm:$0xf]
    %v215 = vld [vmem:[#allocation7 + $0x174] sm:$0xf]
    %v216 = vld [vmem:[#allocation7 + $0x178] sm:$0xf]
    %v217 = vld [vmem:[#allocation7 + $0x17c] sm:$0xf]
    %v218 = vld [vmem:[#allocation7 + $0x180] sm:$0xf]
    %v219 = vld [vmem:[#allocation7 + $0x184] sm:$0xf]
    %v220 = vld [vmem:[#allocation7 + $0x188] sm:$0xf]
    %v221 = vld [vmem:[#allocation7 + $0x18c] sm:$0xf]
    %v222 = vld [vmem:[#allocation7 + $0x190] sm:$0xf]
    %v223 = vld [vmem:[#allocation7 + $0x194] sm:$0xf]
    %v224 = vld [vmem:[#allocation7 + $0x198] sm:$0xf]
    %v225 = vld [vmem:[#allocation7 + $0x19c] sm:$0xf]
    %v226 = vld [vmem:[#allocation7 + $0x1a0] sm:$0xf]
    %v227 = vld [vmem:[#allocation7 + $0x1a4] sm:$0xf]
    %v228 = vld [vmem:[#allocation7 + $0x1a8] sm:$0xf]
    %v229 = vld [vmem:[#allocation7 + $0x1ac] sm:$0xf]
    %v230 = vld [vmem:[#allocation7 + $0x1b0] sm:$0xf]
    %v231 = vld [vmem:[#allocation7 + $0x1b4] sm:$0xf]
    %v232 = vld [vmem:[#allocation7 + $0x1b8] sm:$0xf]
    %v233 = vld [vmem:[#allocation7 + $0x1bc] sm:$0xf]
    %v234 = vld [vmem:[#allocation7 + $0x1c0] sm:$0xf]
    %v235 = vld [vmem:[#allocation7 + $0x1c4] sm:$0xf]
    %v236 = vld [vmem:[#allocation7 + $0x1c8] sm:$0xf]
    %v237 = vld [vmem:[#allocation7 + $0x1cc] sm:$0xf]
    %v238 = vld [vmem:[#allocation7 + $0x1d0] sm:$0xf]
    %v239 = vld [vmem:[#allocation7 + $0x1d4] sm:$0xf]
    %v240 = vld [vmem:[#allocation7 + $0x1d8] sm:$0xf]
    %v241 = vld [vmem:[#allocation7 + $0x1dc] sm:$0xf]
    %v242 = vld [vmem:[#allocation7 + $0x1e0] sm:$0xf]
    %v243 = vld [vmem:[#allocation7 + $0x1e4] sm:$0xf]
    %v244 = vld [vmem:[#allocation7 + $0x1e8] sm:$0xf]
    %v245 = vld [vmem:[#allocation7 + $0x1ec] sm:$0xf]
    %v246 = vld [vmem:[#allocation7 + $0x1f0] sm:$0xf]
    %v247 = vld [vmem:[#allocation7 + $0x1f4] sm:$0xf]
    %v248 = vld [vmem:[#allocation7 + $0x1f8] sm:$0xf]
    %v249 = vld [vmem:[#allocation7 + $0x1fc] sm:$0xf]
    %v250 = vpack.i.b16 %v114, %v114
    %v251 = vperm.slane %v250, 0
    %v269 = vunpack.c.l.b16 %v122
    %v270 = vunpack.c.l.b16 %v123
    %v271 = vunpack.c.l.b16 %v124
    %v272 = vunpack.c.l.b16 %v125
    %v273 = vunpack.c.l.b16 %v126
    %v274 = vunpack.c.l.b16 %v127
    %v275 = vunpack.c.l.b16 %v128
    %v276 = vunpack.c.l.b16 %v129
    %v277 = vunpack.c.l.b16 %v130
    %v278 = vunpack.c.l.b16 %v131
    %v279 = vunpack.c.l.b16 %v132
    %v280 = vunpack.c.l.b16 %v133
    %v281 = vunpack.c.l.b16 %v134
    %v282 = vunpack.c.l.b16 %v135
    %v283 = vunpack.c.l.b16 %v136
    %v284 = vunpack.c.l.b16 %v137
    %v285 = vpack.c.b16 %v270, %v269
    %v286 = vpack.c.b16 %v272, %v271
    %v287 = vpack.c.b16 %v274, %v273
    %v288 = vpack.c.b16 %v276, %v275
    %v289 = vpack.c.b16 %v278, %v277
    %v290 = vpack.c.b16 %v280, %v279
    %v291 = vpack.c.b16 %v282, %v281
    %v292 = vpack.c.b16 %v284, %v283
    %301 = vmatpush.bf16.msra.mxu0 %v292
    %302 = vmatpush.bf16.msra.mxu0 %v291
    %303 = vmatpush.bf16.msra.mxu0 %v290
    %304 = vmatpush.bf16.msra.mxu0 %v289
    %305 = vmatpush.bf16.msra.mxu0 %v288
    %306 = vmatpush.bf16.msra.mxu0 %v287
    %307 = vmatpush.bf16.msra.mxu0 %v286
    %308 = vmatpush.bf16.msra.mxu0 %v285
    %309 = vmatmul.bf16.gmra.mxu0 %v251
    %v310 = vpop.f32.mrf.mxu0
    %v311 = vadd.f32 0.0, %v310
    %v312 = vpop.f32.mrf.mxu0
    %313 = vdwg.mxu0
    %v314 = vpack.i.b16 %v115, %v115
    %v315 = vperm.slane %v314, 0
    %v333 = vunpack.c.l.b16 %v138
    %v334 = vunpack.c.l.b16 %v139
    %v335 = vunpack.c.l.b16 %v140
    %v336 = vunpack.c.l.b16 %v141
    %v337 = vunpack.c.l.b16 %v142
    %v338 = vunpack.c.l.b16 %v143
    %v339 = vunpack.c.l.b16 %v144
    %v340 = vunpack.c.l.b16 %v145
    %v341 = vunpack.c.l.b16 %v146
    %v342 = vunpack.c.l.b16 %v147
    %v343 = vunpack.c.l.b16 %v148
    %v344 = vunpack.c.l.b16 %v149
    %v345 = vunpack.c.l.b16 %v150
    %v346 = vunpack.c.l.b16 %v151
    %v347 = vunpack.c.l.b16 %v152
    %v348 = vunpack.c.l.b16 %v153
    %v349 = vpack.c.b16 %v334, %v333
    %v350 = vpack.c.b16 %v336, %v335
    %v351 = vpack.c.b16 %v338, %v337
    %v352 = vpack.c.b16 %v340, %v339
    %v353 = vpack.c.b16 %v342, %v341
    %v354 = vpack.c.b16 %v344, %v343
    %v355 = vpack.c.b16 %v346, %v345
    %v356 = vpack.c.b16 %v348, %v347
    %365 = vmatpush.bf16.msra.mxu0 %v356
    %366 = vmatpush.bf16.msra.mxu0 %v355
    %367 = vmatpush.bf16.msra.mxu0 %v354
    %368 = vmatpush.bf16.msra.mxu0 %v353
    %369 = vmatpush.bf16.msra.mxu0 %v352
    %370 = vmatpush.bf16.msra.mxu0 %v351
    %371 = vmatpush.bf16.msra.mxu0 %v350
    %372 = vmatpush.bf16.msra.mxu0 %v349
    %373 = vmatmul.bf16.gmra.mxu0 %v315
    %v374 = vpop.f32.mrf.mxu0
    %v375 = vadd.f32 0.0, %v374
    %v376 = vpop.f32.mrf.mxu0
    %377 = vdwg.mxu0
    %v378 = vpack.i.b16 %v116, %v116
    %v379 = vperm.slane %v378, 0
    %v397 = vunpack.c.l.b16 %v154
    %v398 = vunpack.c.l.b16 %v155
    %v399 = vunpack.c.l.b16 %v156
    %v400 = vunpack.c.l.b16 %v157
    %v401 = vunpack.c.l.b16 %v158
    %v402 = vunpack.c.l.b16 %v159
    %v403 = vunpack.c.l.b16 %v160
    %v404 = vunpack.c.l.b16 %v161
    %v405 = vunpack.c.l.b16 %v162
    %v406 = vunpack.c.l.b16 %v163
    %v407 = vunpack.c.l.b16 %v164
    %v408 = vunpack.c.l.b16 %v165
    %v409 = vunpack.c.l.b16 %v166
    %v410 = vunpack.c.l.b16 %v167
    %v411 = vunpack.c.l.b16 %v168
    %v412 = vunpack.c.l.b16 %v169
    %v413 = vpack.c.b16 %v398, %v397
    %v414 = vpack.c.b16 %v400, %v399
    %v415 = vpack.c.b16 %v402, %v401
    %v416 = vpack.c.b16 %v404, %v403
    %v417 = vpack.c.b16 %v406, %v405
    %v418 = vpack.c.b16 %v408, %v407
    %v419 = vpack.c.b16 %v410, %v409
    %v420 = vpack.c.b16 %v412, %v411
    %429 = vmatpush.bf16.msra.mxu0 %v420
    %430 = vmatpush.bf16.msra.mxu0 %v419
    %431 = vmatpush.bf16.msra.mxu0 %v418
    %432 = vmatpush.bf16.msra.mxu0 %v417
    %433 = vmatpush.bf16.msra.mxu0 %v416
    %434 = vmatpush.bf16.msra.mxu0 %v415
    %435 = vmatpush.bf16.msra.mxu0 %v414
    %436 = vmatpush.bf16.msra.mxu0 %v413
    %437 = vmatmul.bf16.gmra.mxu0 %v379
    %v438 = vpop.f32.mrf.mxu0
    %v439 = vadd.f32 0.0, %v438
    %v440 = vpop.f32.mrf.mxu0
    %441 = vdwg.mxu0
    %v442 = vpack.i.b16 %v117, %v117
    %v443 = vperm.slane %v442, 0
    %v461 = vunpack.c.l.b16 %v170
    %v462 = vunpack.c.l.b16 %v171
    %v463 = vunpack.c.l.b16 %v172
    %v464 = vunpack.c.l.b16 %v173
    %v465 = vunpack.c.l.b16 %v174
    %v466 = vunpack.c.l.b16 %v175
    %v467 = vunpack.c.l.b16 %v176
    %v468 = vunpack.c.l.b16 %v177
    %v469 = vunpack.c.l.b16 %v178
    %v470 = vunpack.c.l.b16 %v179
    %v471 = vunpack.c.l.b16 %v180
    %v472 = vunpack.c.l.b16 %v181
    %v473 = vunpack.c.l.b16 %v182
    %v474 = vunpack.c.l.b16 %v183
    %v475 = vunpack.c.l.b16 %v184
    %v476 = vunpack.c.l.b16 %v185
    %v477 = vpack.c.b16 %v462, %v461
    %v478 = vpack.c.b16 %v464, %v463
    %v479 = vpack.c.b16 %v466, %v465
    %v480 = vpack.c.b16 %v468, %v467
    %v481 = vpack.c.b16 %v470, %v469
    %v482 = vpack.c.b16 %v472, %v471
    %v483 = vpack.c.b16 %v474, %v473
    %v484 = vpack.c.b16 %v476, %v475
    %493 = vmatpush.bf16.msra.mxu0 %v484
    %494 = vmatpush.bf16.msra.mxu0 %v483
    %495 = vmatpush.bf16.msra.mxu0 %v482
    %496 = vmatpush.bf16.msra.mxu0 %v481
    %497 = vmatpush.bf16.msra.mxu0 %v480
    %498 = vmatpush.bf16.msra.mxu0 %v479
    %499 = vmatpush.bf16.msra.mxu0 %v478
    %500 = vmatpush.bf16.msra.mxu0 %v477
    %501 = vmatmul.bf16.gmra.mxu0 %v443
    %v502 = vpop.f32.mrf.mxu0
    %v503 = vadd.f32 0.0, %v502
    %v504 = vpop.f32.mrf.mxu0
    %505 = vdwg.mxu0
    %v506 = vpack.i.b16 %v118, %v118
    %v507 = vperm.slane %v506, 0
    %v525 = vunpack.c.l.b16 %v186
    %v526 = vunpack.c.l.b16 %v187
    %v527 = vunpack.c.l.b16 %v188
    %v528 = vunpack.c.l.b16 %v189
    %v529 = vunpack.c.l.b16 %v190
    %v530 = vunpack.c.l.b16 %v191
    %v531 = vunpack.c.l.b16 %v192
    %v532 = vunpack.c.l.b16 %v193
    %v533 = vunpack.c.l.b16 %v194
    %v534 = vunpack.c.l.b16 %v195
    %v535 = vunpack.c.l.b16 %v196
    %v536 = vunpack.c.l.b16 %v197
    %v537 = vunpack.c.l.b16 %v198
    %v538 = vunpack.c.l.b16 %v199
    %v539 = vunpack.c.l.b16 %v200
    %v540 = vunpack.c.l.b16 %v201
    %v541 = vpack.c.b16 %v526, %v525
    %v542 = vpack.c.b16 %v528, %v527
    %v543 = vpack.c.b16 %v530, %v529
    %v544 = vpack.c.b16 %v532, %v531
    %v545 = vpack.c.b16 %v534, %v533
    %v546 = vpack.c.b16 %v536, %v535
    %v547 = vpack.c.b16 %v538, %v537
    %v548 = vpack.c.b16 %v540, %v539
    %557 = vmatpush.bf16.msra.mxu0 %v548
    %558 = vmatpush.bf16.msra.mxu0 %v547
    %559 = vmatpush.bf16.msra.mxu0 %v546
    %560 = vmatpush.bf16.msra.mxu0 %v545
    %561 = vmatpush.bf16.msra.mxu0 %v544
    %562 = vmatpush.bf16.msra.mxu0 %v543
    %563 = vmatpush.bf16.msra.mxu0 %v542
    %564 = vmatpush.bf16.msra.mxu0 %v541
    %565 = vmatmul.bf16.gmra.mxu0 %v507
    %v566 = vpop.f32.mrf.mxu0
    %v567 = vadd.f32 0.0, %v566
    %v568 = vpop.f32.mrf.mxu0
    %569 = vdwg.mxu0
    %v570 = vpack.i.b16 %v119, %v119
    %v571 = vperm.slane %v570, 0
    %v589 = vunpack.c.l.b16 %v202
    %v590 = vunpack.c.l.b16 %v203
    %v591 = vunpack.c.l.b16 %v204
    %v592 = vunpack.c.l.b16 %v205
    %v593 = vunpack.c.l.b16 %v206
    %v594 = vunpack.c.l.b16 %v207
    %v595 = vunpack.c.l.b16 %v208
    %v596 = vunpack.c.l.b16 %v209
    %v597 = vunpack.c.l.b16 %v210
    %v598 = vunpack.c.l.b16 %v211
    %v599 = vunpack.c.l.b16 %v212
    %v600 = vunpack.c.l.b16 %v213
    %v601 = vunpack.c.l.b16 %v214
    %v602 = vunpack.c.l.b16 %v215
    %v603 = vunpack.c.l.b16 %v216
    %v604 = vunpack.c.l.b16 %v217
    %v605 = vpack.c.b16 %v590, %v589
    %v606 = vpack.c.b16 %v592, %v591
    %v607 = vpack.c.b16 %v594, %v593
    %v608 = vpack.c.b16 %v596, %v595
    %v609 = vpack.c.b16 %v598, %v597
    %v610 = vpack.c.b16 %v600, %v599
    %v611 = vpack.c.b16 %v602, %v601
    %v612 = vpack.c.b16 %v604, %v603
    %621 = vmatpush.bf16.msra.mxu0 %v612
    %622 = vmatpush.bf16.msra.mxu0 %v611
    %623 = vmatpush.bf16.msra.mxu0 %v610
    %624 = vmatpush.bf16.msra.mxu0 %v609
    %625 = vmatpush.bf16.msra.mxu0 %v608
    %626 = vmatpush.bf16.msra.mxu0 %v607
    %627 = vmatpush.bf16.msra.mxu0 %v606
    %628 = vmatpush.bf16.msra.mxu0 %v605
    %629 = vmatmul.bf16.gmra.mxu0 %v571
    %v630 = vpop.f32.mrf.mxu0
    %v631 = vadd.f32 0.0, %v630
    %v632 = vpop.f32.mrf.mxu0
    %633 = vdwg.mxu0
    %v634 = vpack.i.b16 %v120, %v120
    %v635 = vperm.slane %v634, 0
    %v653 = vunpack.c.l.b16 %v218
    %v654 = vunpack.c.l.b16 %v219
    %v655 = vunpack.c.l.b16 %v220
    %v656 = vunpack.c.l.b16 %v221
    %v657 = vunpack.c.l.b16 %v222
    %v658 = vunpack.c.l.b16 %v223
    %v659 = vunpack.c.l.b16 %v224
    %v660 = vunpack.c.l.b16 %v225
    %v661 = vunpack.c.l.b16 %v226
    %v662 = vunpack.c.l.b16 %v227
    %v663 = vunpack.c.l.b16 %v228
    %v664 = vunpack.c.l.b16 %v229
    %v665 = vunpack.c.l.b16 %v230
    %v666 = vunpack.c.l.b16 %v231
    %v667 = vunpack.c.l.b16 %v232
    %v668 = vunpack.c.l.b16 %v233
    %v669 = vpack.c.b16 %v654, %v653
    %v670 = vpack.c.b16 %v656, %v655
    %v671 = vpack.c.b16 %v658, %v657
    %v672 = vpack.c.b16 %v660, %v659
    %v673 = vpack.c.b16 %v662, %v661
    %v674 = vpack.c.b16 %v664, %v663
    %v675 = vpack.c.b16 %v666, %v665
    %v676 = vpack.c.b16 %v668, %v667
    %685 = vmatpush.bf16.msra.mxu0 %v676
    %686 = vmatpush.bf16.msra.mxu0 %v675
    %687 = vmatpush.bf16.msra.mxu0 %v674
    %688 = vmatpush.bf16.msra.mxu0 %v673
    %689 = vmatpush.bf16.msra.mxu0 %v672
    %690 = vmatpush.bf16.msra.mxu0 %v671
    %691 = vmatpush.bf16.msra.mxu0 %v670
    %692 = vmatpush.bf16.msra.mxu0 %v669
    %693 = vmatmul.bf16.gmra.mxu0 %v635
    %v694 = vpop.f32.mrf.mxu0
    %v695 = vadd.f32 0.0, %v694
    %v696 = vpop.f32.mrf.mxu0
    %697 = vdwg.mxu0
    %v698 = vpack.i.b16 %v121, %v121
    %v699 = vperm.slane %v698, 0
    %v717 = vunpack.c.l.b16 %v234
    %v718 = vunpack.c.l.b16 %v235
    %v719 = vunpack.c.l.b16 %v236
    %v720 = vunpack.c.l.b16 %v237
    %v721 = vunpack.c.l.b16 %v238
    %v722 = vunpack.c.l.b16 %v239
    %v723 = vunpack.c.l.b16 %v240
    %v724 = vunpack.c.l.b16 %v241
    %v725 = vunpack.c.l.b16 %v242
    %v726 = vunpack.c.l.b16 %v243
    %v727 = vunpack.c.l.b16 %v244
    %v728 = vunpack.c.l.b16 %v245
    %v729 = vunpack.c.l.b16 %v246
    %v730 = vunpack.c.l.b16 %v247
    %v731 = vunpack.c.l.b16 %v248
    %v732 = vunpack.c.l.b16 %v249
    %v733 = vpack.c.b16 %v718, %v717
    %v734 = vpack.c.b16 %v720, %v719
    %v735 = vpack.c.b16 %v722, %v721
    %v736 = vpack.c.b16 %v724, %v723
    %v737 = vpack.c.b16 %v726, %v725
    %v738 = vpack.c.b16 %v728, %v727
    %v739 = vpack.c.b16 %v730, %v729
    %v740 = vpack.c.b16 %v732, %v731
    %749 = vmatpush.bf16.msra.mxu0 %v740
    %750 = vmatpush.bf16.msra.mxu0 %v739
    %751 = vmatpush.bf16.msra.mxu0 %v738
    %752 = vmatpush.bf16.msra.mxu0 %v737
    %753 = vmatpush.bf16.msra.mxu0 %v736
    %754 = vmatpush.bf16.msra.mxu0 %v735
    %755 = vmatpush.bf16.msra.mxu0 %v734
    %756 = vmatpush.bf16.msra.mxu0 %v733
    %757 = vmatmul.bf16.gmra.mxu0 %v699
    %v758 = vpop.f32.mrf.mxu0
    %v759 = vadd.f32 0.0, %v758
    %v760 = vpop.f32.mrf.mxu0
    %761 = vdwg.mxu0
    %v762 = vsel %vm97, %v311, 0.0
    %v763 = vsel %vm97, %v375, 0.0
    %v764 = vadd.f32 %v762, %v763
    %v765 = vsel %vm97, %v439, 0.0
    %v766 = vadd.f32 %v764, %v765
    %v767 = vsel %vm97, %v503, 0.0
    %v768 = vadd.f32 %v766, %v767
    %v769 = vsel %vm97, %v567, 0.0
    %v770 = vadd.f32 %v768, %v769
    %v771 = vsel %vm97, %v631, 0.0
    %v772 = vadd.f32 %v770, %v771
    %v773 = vsel %vm97, %v695, 0.0
    %v774 = vadd.f32 %v772, %v773
    %v775 = vsel %vm97, %v759, 0.0
    %v776 = vadd.f32 %v774, %v775
    %v777 = vadd.f32 %v776, %v68
    %vm778 = vcmp.gt.f32.partialorder %v777, 0.0
    %v779 = vmul.f32 %v777, 0.2
    %v780 = vsel %vm778, %v777, %v779
    %v781 = vmul.f32 %v780, %v69
    %v782 = vadd.f32 %v781, %v70
    %v783 = vsel %vm97, %v782, 0.0
    %784 = vadd.xlane.f32.xlu0 %v783
    %v785 = vpop.xlane.xlu0 %784
    %v786 = vsub.f32 0.0, %v785
    %v787 = vmul.f32 %v786, 1.442695
    %v788 = vpow.pop %v787
    %v789 = vadd.f32 %v788, 1.0
    %v790 = vrcp.pop %v789
    %v791 = vmul.f32 %v789, %v790
    %v792 = vsub.f32 1.0, %v791
    %v793 = vmul.f32 %v790, %v792
    %v794 = vadd.f32 %v790, %v793
    %vm795 = vweird.f32 %v789
    %vm796 = vweird.f32 %v790
    %vm797 = vmor %vm795, %vm796
    %v798 = vsel %vm797, %v790, %v794
    %v799 = vand.u32 2147483647, %v789
    %vm800 = vcmp.eq.f32.partialorder %v799, 8.507059e+37
    %v801 = vand.u32 %v789, 2147483648
    %v802 = vor.u32 1.1754944e-38, %v801
    %v803 = vsel %vm800, %v802, %v798
    %v804 = vmul.f32 1.0, %v803
    %vm805 = vcmask 0
    %806 = vst.msk [vmem:[#allocation8] sm:$0x1] %vm805, %v804
    // Predicated region
    $region26: #{tpu_custom_call.1} parent=1 // pred_check
      _
    $region27: #{tpu_custom_call.1} parent=1 // pred_check_branch
      %808 = sbr.rel (0) target = $region29
    $region28: #{tpu_custom_call.1} parent=1 // pred_region
      %810 = vsyncadd [#allocation4], 0
      %s812 = sshll.u32 [#allocation8], 4
      %s813 = int_to_ptr.vmem [resolvable:$true] %s812
      %s814 = sshll.u32 %s3, 4
      %s815 = int_to_ptr.hbm [resolvable:$true] %s814
      %817 = dma.vmem_to_hbm [thread:$0]  %s813, 16, %s815, [#allocation4]
    $region29: #{tpu_custom_call.1} parent=1 // pred_fallthru
      _
    // Predicated region
    $region30: #{tpu_custom_call.1} parent=1 // pred_check
      _
    $region31: #{tpu_custom_call.1} parent=1 // pred_check_branch
      %819 = sbr.rel (0) target = $region33
    $region32: #{tpu_custom_call.1} parent=1 // pred_region
      %821 = dma.done [#allocation4], 16
    $region33: #{tpu_custom_call.1} parent=1 // pred_fallthru
      _
    %822 = vsyncpa [#allocation3], 1
    %823 = vsyncpa [#allocation6], 1
    %824 = vsyncpa [#allocation4], 1

</llo_original>
